<compile_context>
chip_gen: v6e
topology: v6e:2x2x1
jax: 0.10.0
libtpu: 0.0.40
codegen_flags: <defaults>
</compile_context>

<pallas_src>
import functools

import jax
import jax.numpy as jnp
from jax.experimental import pallas as pl
from jax.experimental.pallas import tpu as pltpu


def _dice_partial_kernel(x_ref, t_ref, inter_ref, union_ref,
                         inter_acc, union_acc, *, n_rows, tile_rows):
    """One grid step: reduce one (tile_rows, 128) tile of one sample.

    x_ref, t_ref          : (tile_rows, 128) VMEM tiles (native dtype)
    inter_ref, union_ref  : (1, 128) f32 output blocks (written at last step)
    inter_acc, union_acc  : (1, 128) f32 VMEM scratch accumulators
    """
    j = pl.program_id(1)

    @pl.when(j == 0)
    def _init():
        inter_acc[...] = jnp.zeros_like(inter_acc)
        union_acc[...] = jnp.zeros_like(union_acc)

    x = x_ref[...].astype(jnp.float32)
    t = t_ref[...].astype(jnp.float32)

    if n_rows % tile_rows != 0:
        # Ragged last row-tile: zero rows past the true extent.
        row = jax.lax.broadcasted_iota(jnp.int32, x.shape, 0) + j * tile_rows
        valid = row < n_rows
        x = jnp.where(valid, x, 0.0)
        t = jnp.where(valid, t, 0.0)

    # Cross-sublane reduce (XLU slot, hidden under the DMA) down to per-lane
    # partials; the final cross-lane reduce happens in the JAX glue.
    inter_acc[...] += jnp.sum(x * t, axis=0, keepdims=True)   # (1, 128)
    union_acc[...] += jnp.sum(x + t, axis=0, keepdims=True)   # (1, 128)

    @pl.when(j == pl.num_programs(1) - 1)
    def _finalize():
        inter_ref[...] = inter_acc[...]
        union_ref[...] = union_acc[...]


def _round_up(a, b):
    return ((a + b - 1) // b) * b


@functools.partial(jax.jit, static_argnames=("tile_rows",))
def dice_loss(inp, target, tile_rows=2048):
    """Pallas implementation of DiceLoss.forward (PyTorch semantics)."""
    N = inp.shape[0]
    x2 = jnp.reshape(inp, (N, -1))
    t2 = jnp.reshape(target, (N, -1))
    D = x2.shape[1]

    # Lane-align D.  When D % 128 == 0 (typical C*H*W) the reshape below is a
    # free metadata op -- no extra HBM pass.  Only an unaligned D pays a small
    # one-off zero pad (<= 127 elements per row; zeros don't change the sums).
    D_pad = _round_up(D, 128)
    if D_pad != D:
        x2 = jnp.pad(x2, ((0, 0), (0, D_pad - D)))
        t2 = jnp.pad(t2, ((0, 0), (0, D_pad - D)))
    R = D_pad // 128
    x3 = jnp.reshape(x2, (N, R, 128))
    t3 = jnp.reshape(t2, (N, R, 128))

    # Row-tile size: multiple of 8 sublanes, capped so double-buffered input
    # tiles stay well inside scoped VMEM on all of v5e/v6e/v7x.
    tr = max(8, (tile_rows // 8) * 8)
    if R <= tr:
        tr = R                      # single full-extent row tile per sample
    num_row_tiles = -(-R // tr)

    kernel = functools.partial(_dice_partial_kernel, n_rows=R, tile_rows=tr)

    inter_out, union_out = pl.pallas_call(
        kernel,
        out_shape=(
            jax.ShapeDtypeStruct((N, 1, 128), jnp.float32),
            jax.ShapeDtypeStruct((N, 1, 128), jnp.float32),
        ),
        grid_spec=pltpu.PrefetchScalarGridSpec(
            num_scalar_prefetch=0,
            grid=(N, num_row_tiles),
            in_specs=[
                pl.BlockSpec((pl.Squeezed(), tr, 128), lambda n, j: (n, j, 0)),
                pl.BlockSpec((pl.Squeezed(), tr, 128), lambda n, j: (n, j, 0)),
            ],
            out_specs=[
                pl.BlockSpec((pl.Squeezed(), 1, 128), lambda n, j: (n, 0, 0)),
                pl.BlockSpec((pl.Squeezed(), 1, 128), lambda n, j: (n, 0, 0)),
            ],
            scratch_shapes=[
                pltpu.VMEM((1, 128), jnp.float32),
                pltpu.VMEM((1, 128), jnp.float32),
            ],
        ),
        compiler_params=pltpu.CompilerParams(
            dimension_semantics=("parallel", "arbitrary"),
        ),
    )(x3, t3)

    smooth = jnp.float32(1e-06)
    inter = jnp.sum(inter_out[:, 0, :], axis=-1)    # (N,) sum(x * t)
    union = jnp.sum(union_out[:, 0, :], axis=-1)    # (N,) sum(x) + sum(t)
    dice = 2.0 * (inter + smooth) / (union + smooth)
    return 1.0 - jnp.sum(dice) / N


def _dice_loss_ref(inp, target):
    """Pure-JAX reference mirroring the PyTorch forward exactly."""
    N = inp.shape[0]
    smooth = 1e-06
    xf = jnp.reshape(inp, (N, -1)).astype(jnp.float32)
    tf = jnp.reshape(target, (N, -1)).astype(jnp.float32)
    inter = jnp.sum(xf * tf, axis=1)
    dice = 2.0 * (inter + smooth) / (jnp.sum(xf, axis=1) + jnp.sum(tf, axis=1) + smooth)
    return 1.0 - jnp.sum(dice) / N


if __name__ == "__main__":
    key = jax.random.PRNGKey(0)
    k1, k2 = jax.random.split(key)

    # Small NCHW shapes consistent with a segmentation net output / mask.
    N, C, H, W = 2, 4, 16, 16
    inp = jax.nn.sigmoid(jax.random.normal(k1, (N, C, H, W), dtype=jnp.float32))
    target = (jax.random.uniform(k2, (N, C, H, W)) > 0.5).astype(jnp.float32)

    loss = jax.block_until_ready(dice_loss(inp, target))
    ref = _dice_loss_ref(inp, target)
    assert jnp.allclose(loss, ref, atol=1e-5, rtol=1e-5), (loss, ref)

    # Exercise the multi-row-tile + ragged-tail mask path with a forced tiny
    # row tile and a lane-unaligned D (D = 4*18*16 = 1152 -> 9 rows of 128).
    N2, C2, H2, W2 = 2, 4, 18, 16
    inp2 = jax.nn.sigmoid(jax.random.normal(k1, (N2, C2, H2, W2), dtype=jnp.float32))
    target2 = (jax.random.uniform(k2, (N2, C2, H2, W2)) > 0.5).astype(jnp.float32)
    loss2 = jax.block_until_ready(dice_loss(inp2, target2, tile_rows=8))
    ref2 = _dice_loss_ref(inp2, target2)
    assert jnp.allclose(loss2, ref2, atol=1e-5, rtol=1e-5), (loss2, ref2)

    # bf16 streaming path (inputs kept in bf16 in HBM, cast in-kernel).
    loss3 = jax.block_until_ready(dice_loss(inp.astype(jnp.bfloat16),
                                            target.astype(jnp.bfloat16)))
    ref3 = _dice_loss_ref(inp.astype(jnp.bfloat16), target.astype(jnp.bfloat16))
    assert jnp.allclose(loss3, ref3, atol=2e-3, rtol=2e-3), (loss3, ref3)

    print("KERNEL_OK")
</pallas_src>

<mosaic_0001>
module attributes {stable_mosaic.version = 11 : i64} {
  func.func @_dice_partial_kernel(%arg0: i32, %arg1: i32, %arg2: memref<1x8x128xf32, #tpu.memory_space<vmem>>, %arg3: memref<1x8x128xf32, #tpu.memory_space<vmem>>, %arg4: memref<1x1x128xf32, #tpu.memory_space<vmem>>, %arg5: memref<1x1x128xf32, #tpu.memory_space<vmem>>, %arg6: memref<1x128xf32, #tpu.memory_space<vmem>>, %arg7: memref<1x128xf32, #tpu.memory_space<vmem>>) attributes {dimension_semantics = [#tpu.dimension_semantics<parallel>, #tpu.dimension_semantics<arbitrary>], iteration_bounds = array<i64: 2, 1>, scalar_prefetch = 0 : i64, scratch_operands = 2 : i64, tpu.core_type = #tpu.core_type<tc>, window_params = [{transform_indices = @transform_0, window_bounds = array<i64: 1, 8, 128>}, {transform_indices = @transform_1, window_bounds = array<i64: 1, 8, 128>}, {transform_indices = @transform_2, window_bounds = array<i64: 1, 1, 128>}, {transform_indices = @transform_3, window_bounds = array<i64: 1, 1, 128>}]} {
    %c0_i32 = arith.constant 0 : i32
    %0 = arith.cmpi eq, %arg1, %c0_i32 : i32
    %1 = arith.extui %0 : i1 to i32
    %c0_i32_0 = arith.constant 0 : i32
    %2 = arith.cmpi ne, %1, %c0_i32_0 : i32
    scf.if %2 {
      %cst_17 = arith.constant 0.000000e+00 : f32
      %22 = vector.broadcast %cst_17 : f32 to vector<1x128xf32>
      %c0_18 = arith.constant 0 : index
      %c0_19 = arith.constant 0 : index
      %23 = vector.load %arg6[%c0_18, %c0_19] : memref<1x128xf32, #tpu.memory_space<vmem>>, vector<1x128xf32>
      tpu.vector_store %arg6[%c0_18, %c0_19], %22 {strides = array<i32>} : memref<1x128xf32, #tpu.memory_space<vmem>>, vector<1x128xf32>,
      %cst_20 = arith.constant 0.000000e+00 : f32
      %24 = vector.broadcast %cst_20 : f32 to vector<1x128xf32>
      %c0_21 = arith.constant 0 : index
      %c0_22 = arith.constant 0 : index
      %25 = vector.load %arg7[%c0_21, %c0_22] : memref<1x128xf32, #tpu.memory_space<vmem>>, vector<1x128xf32>
      tpu.vector_store %arg7[%c0_21, %c0_22], %24 {strides = array<i32>} : memref<1x128xf32, #tpu.memory_space<vmem>>, vector<1x128xf32>,
    } else {
    }
    %c0 = arith.constant 0 : index
    %c0_1 = arith.constant 0 : index
    %c0_2 = arith.constant 0 : index
    %3 = vector.load %arg2[%c0, %c0_1, %c0_2] : memref<1x8x128xf32, #tpu.memory_space<vmem>>, vector<1x8x128xf32>
    %4 = vector.shape_cast %3 : vector<1x8x128xf32> to vector<8x128xf32>
    %c0_3 = arith.constant 0 : index
    %c0_4 = arith.constant 0 : index
    %c0_5 = arith.constant 0 : index
    %5 = vector.load %arg3[%c0_3, %c0_4, %c0_5] : memref<1x8x128xf32, #tpu.memory_space<vmem>>, vector<1x8x128xf32>
    %6 = vector.shape_cast %5 : vector<1x8x128xf32> to vector<8x128xf32>
    %c0_6 = arith.constant 0 : index
    %c0_7 = arith.constant 0 : index
    %7 = vector.load %arg6[%c0_6, %c0_7] : memref<1x128xf32, #tpu.memory_space<vmem>>, vector<1x128xf32>
    %8 = arith.mulf %4, %6 : vector<8x128xf32>
    %cst = arith.constant dense<0.000000e+00> : vector<128xf32>
    %9 = vector.multi_reduction <add>, %8, %cst [0] : vector<8x128xf32> to vector<128xf32>
    %10 = vector.shape_cast %9 : vector<128xf32> to vector<1x128xf32>
    %11 = arith.addf %7, %10 : vector<1x128xf32>
    %c0_8 = arith.constant 0 : index
    %c0_9 = arith.constant 0 : index
    %12 = vector.load %arg6[%c0_8, %c0_9] : memref<1x128xf32, #tpu.memory_space<vmem>>, vector<1x128xf32>
    tpu.vector_store %arg6[%c0_8, %c0_9], %11 {strides = array<i32>} : memref<1x128xf32, #tpu.memory_space<vmem>>, vector<1x128xf32>,
    %c0_10 = arith.constant 0 : index
    %c0_11 = arith.constant 0 : index
    %13 = vector.load %arg7[%c0_10, %c0_11] : memref<1x128xf32, #tpu.memory_space<vmem>>, vector<1x128xf32>
    %14 = arith.addf %4, %6 : vector<8x128xf32>
    %cst_12 = arith.constant dense<0.000000e+00> : vector<128xf32>
    %15 = vector.multi_reduction <add>, %14, %cst_12 [0] : vector<8x128xf32> to vector<128xf32>
    %16 = vector.shape_cast %15 : vector<128xf32> to vector<1x128xf32>
    %17 = arith.addf %13, %16 : vector<1x128xf32>
    %c0_13 = arith.constant 0 : index
    %c0_14 = arith.constant 0 : index
    %18 = vector.load %arg7[%c0_13, %c0_14] : memref<1x128xf32, #tpu.memory_space<vmem>>, vector<1x128xf32>
    tpu.vector_store %arg7[%c0_13, %c0_14], %17 {strides = array<i32>} : memref<1x128xf32, #tpu.memory_space<vmem>>, vector<1x128xf32>,
    %c0_i32_15 = arith.constant 0 : i32
    %19 = arith.cmpi eq, %arg1, %c0_i32_15 : i32
    %20 = arith.extui %19 : i1 to i32
    %c0_i32_16 = arith.constant 0 : i32
    %21 = arith.cmpi ne, %20, %c0_i32_16 : i32
    scf.if %21 {
      %c0_17 = arith.constant 0 : index
      %c0_18 = arith.constant 0 : index
      %22 = vector.load %arg6[%c0_17, %c0_18] : memref<1x128xf32, #tpu.memory_space<vmem>>, vector<1x128xf32>
      %c0_19 = arith.constant 0 : index
      %c0_20 = arith.constant 0 : index
      %c0_21 = arith.constant 0 : index
      %23 = vector.load %arg4[%c0_19, %c0_20, %c0_21] : memref<1x1x128xf32, #tpu.memory_space<vmem>>, vector<1x1x128xf32>
      %24 = vector.shape_cast %23 : vector<1x1x128xf32> to vector<1x128xf32>
      %25 = vector.shape_cast %22 : vector<1x128xf32> to vector<1x1x128xf32>
      tpu.vector_store %arg4[%c0_19, %c0_20, %c0_21], %25 {strides = array<i32>} : memref<1x1x128xf32, #tpu.memory_space<vmem>>, vector<1x1x128xf32>,
      %c0_22 = arith.constant 0 : index
      %c0_23 = arith.constant 0 : index
      %26 = vector.load %arg7[%c0_22, %c0_23] : memref<1x128xf32, #tpu.memory_space<vmem>>, vector<1x128xf32>
      %c0_24 = arith.constant 0 : index
      %c0_25 = arith.constant 0 : index
      %c0_26 = arith.constant 0 : index
      %27 = vector.load %arg5[%c0_24, %c0_25, %c0_26] : memref<1x1x128xf32, #tpu.memory_space<vmem>>, vector<1x1x128xf32>
      %28 = vector.shape_cast %27 : vector<1x1x128xf32> to vector<1x128xf32>
      %29 = vector.shape_cast %26 : vector<1x128xf32> to vector<1x1x128xf32>
      tpu.vector_store %arg5[%c0_24, %c0_25, %c0_26], %29 {strides = array<i32>} : memref<1x1x128xf32, #tpu.memory_space<vmem>>, vector<1x1x128xf32>,
    } else {
    }
    return
  }
  func.func @transform_0(%arg0: i32, %arg1: i32) -> (i32, i32, i32) {
    %c0_i32 = arith.constant 0 : i32
    %c0_i32_0 = arith.constant 0 : i32
    return %arg0, %arg1, %c0_i32 : i32, i32, i32
  }
  func.func @transform_1(%arg0: i32, %arg1: i32) -> (i32, i32, i32) {
    %c0_i32 = arith.constant 0 : i32
    %c0_i32_0 = arith.constant 0 : i32
    return %arg0, %arg1, %c0_i32 : i32, i32, i32
  }
  func.func @transform_2(%arg0: i32, %arg1: i32) -> (i32, i32, i32) {
    %c0_i32 = arith.constant 0 : i32
    %c0_i32_0 = arith.constant 0 : i32
    %c0_i32_1 = arith.constant 0 : i32
    return %arg0, %c0_i32, %c0_i32_0 : i32, i32, i32
  }
  func.func @transform_3(%arg0: i32, %arg1: i32) -> (i32, i32, i32) {
    %c0_i32 = arith.constant 0 : i32
    %c0_i32_0 = arith.constant 0 : i32
    %c0_i32_1 = arith.constant 0 : i32
    return %arg0, %c0_i32, %c0_i32_0 : i32, i32, i32
  }
}

</mosaic_0001>

<llo_original>
// kernel: dice_loss.1
$region0: #{dice_loss.1}
  #allocation0 [shape = 'u32[]', space=smem, size = 0x4, offset = 0x4, fixed_abs, tag = 'smem constant byte address 0x4 - core index']
  #allocation1 [shape = 'u32[144,128]{1,0:T(1,128)}', space=vmem, size = 0x12000, scoped, tag = 'internal scratch']
  #allocation2 [shape = 'f32[1,128]{1,0:T(1,128)}', space=vmem, size = 0x200, scoped, tag = 'scratch operand']
  #allocation3 [shape = 'f32[1,128]{1,0:T(1,128)}', space=vmem, size = 0x200, scoped, tag = 'scratch operand']
  %s0 = inlined_call_operand.vmem [shape: f32[2,8,128], index: 0, kind: input, shape index: {}]
  %s1 = inlined_call_operand.vmem [shape: f32[2,8,128], index: 1, kind: input, shape index: {}]
  %s2 = inlined_call_operand.vmem [shape: f32[2,1,128], index: 2, kind: output, shape index: {0}]
  %s3 = inlined_call_operand.vmem [shape: f32[2,1,128], index: 3, kind: output, shape index: {1}]
  %4 = xla_tuple %s2, %s3
  %s5 = sld [smem:[#allocation0]]
  $region57: #{dice_loss.1} parent=0
    _
  %s7 = ssub.s32 1, %s5
  %s8 = scalar_select 0, %s7, %s5
  loop: start=0, step=1, limit=4
  $region2: #{dice_loss.1} parent=0 // loop_pre_header
    _
  $region3: #{dice_loss.1} parent=0 // loop_header
    %s10 = sphi 0, %s14
    %p11 = scmp.ge.s32.totalorder %s10, 4
    %s17 = sphi 0, %s29
    %s18 = sphi 0, %s25
    %s19 = sphi 0, %s17
    %s20 = sphi 0, %s18
    %s21 = sphi 0, %s19
    %s22 = sphi 0, %s20
    %s34 = sphi 0, %s36
    %s37 = sphi 0, %s34
    %s38 = sphi 0, %s37
    %s54 = sphi 0, %s38
    %s62 = sphi 0, %s64
    %s65 = sphi 0, %s62
    %s66 = sphi 0, %s65
    %s82 = sphi 0, %s66
    %s88 = sphi 0, %s90
    %s91 = sphi 0, %s88
    %s92 = sphi 0, %s91
    %s108 = sphi 0, %s92
    %s114 = sphi 0, %s116
    %s117 = sphi 0, %s114
    %s118 = sphi 0, %s117
    %s134 = sphi 0, %s118
  $region4: #{dice_loss.1} parent=0 // loop_header_branch
    %13 = sbr.rel (%p11) target = $region8
  $region5: #{dice_loss.1} parent=0 // loop_body
    %s15 = ssub.s32 %s10, 1
    %s16 = ssub.s32 %s10, 2
    %s23 = sadd.s32 1, %s18
    %p24 = scmp.ge.s32.totalorder %s23, 1
    %s25 = scalar_select %p24, 0, %s23
    %s26 = sadd.s32 1, %s17
    %s27 = scalar_select %p24, %s26, %s17
    %p28 = scmp.ge.s32.totalorder %s27, 2
    %s29 = scalar_select %p28, 0, %s27
    %s30 = ssub.s32 %s17, %s29
    %s31 = ssub.s32 %s18, %s25
    %s32 = sor.u32 %s30, %s31
    %p33 = scmp.eq.s32.totalorder %s32, 0
    %s35 = sadd.s32 %s34, 1
    %s36 = scalar_select %p33, %s34, %s35
    %p39 = pneg %p33
    %p40 = scmp.eq.s32.totalorder %s10, 1
    %p41 = por %p39, %p40
    %p42 = scmp.ne.s32.totalorder %s34, %s37
    %p43 = scmp.eq.s32.totalorder %s10, 0
    %p44 = por %p42, %p43
    %p45 = scmp.ne.s32.totalorder %s34, %s37
    %p46 = scmp.eq.s32.totalorder %s15, 1
    %p47 = por %p45, %p46
    %p48 = scmp.ne.s32.totalorder %s37, %s38
    %p49 = scmp.eq.s32.totalorder %s15, 0
    %p50 = por %p48, %p49
    %p51 = scmp.ne.s32.totalorder %s37, %s38
    %p52 = scmp.eq.s32.totalorder %s16, 1
    %p53 = por %p51, %p52
    %p55 = scmp.ne.s32.totalorder %s38, %s54
    %p56 = scmp.eq.s32.totalorder %s16, 0
    %p57 = por %p55, %p56
    %s58 = ssub.s32 %s17, %s29
    %s59 = ssub.s32 %s18, %s25
    %s60 = sor.u32 %s58, %s59
    %p61 = scmp.eq.s32.totalorder %s60, 0
    %s63 = sadd.s32 %s62, 1
    %s64 = scalar_select %p61, %s62, %s63
    %p67 = pneg %p61
    %p68 = scmp.eq.s32.totalorder %s10, 1
    %p69 = por %p67, %p68
    %p70 = scmp.ne.s32.totalorder %s62, %s65
    %p71 = scmp.eq.s32.totalorder %s10, 0
    %p72 = por %p70, %p71
    %p73 = scmp.ne.s32.totalorder %s62, %s65
    %p74 = scmp.eq.s32.totalorder %s15, 1
    %p75 = por %p73, %p74
    %p76 = scmp.ne.s32.totalorder %s65, %s66
    %p77 = scmp.eq.s32.totalorder %s15, 0
    %p78 = por %p76, %p77
    %p79 = scmp.ne.s32.totalorder %s65, %s66
    %p80 = scmp.eq.s32.totalorder %s16, 1
    %p81 = por %p79, %p80
    %p83 = scmp.ne.s32.totalorder %s66, %s82
    %p84 = scmp.eq.s32.totalorder %s16, 0
    %p85 = por %p83, %p84
    %s86 = ssub.s32 %s17, %s29
    %p87 = scmp.eq.s32.totalorder %s86, 0
    %s89 = sadd.s32 %s88, 1
    %s90 = scalar_select %p87, %s88, %s89
    %p93 = pneg %p87
    %p94 = scmp.eq.s32.totalorder %s10, 1
    %p95 = por %p93, %p94
    %p96 = scmp.ne.s32.totalorder %s88, %s91
    %p97 = scmp.eq.s32.totalorder %s10, 0
    %p98 = por %p96, %p97
    %p99 = scmp.ne.s32.totalorder %s88, %s91
    %p100 = scmp.eq.s32.totalorder %s15, 1
    %p101 = por %p99, %p100
    %p102 = scmp.ne.s32.totalorder %s91, %s92
    %p103 = scmp.eq.s32.totalorder %s15, 0
    %p104 = por %p102, %p103
    %p105 = scmp.ne.s32.totalorder %s91, %s92
    %p106 = scmp.eq.s32.totalorder %s16, 1
    %p107 = por %p105, %p106
    %p109 = scmp.ne.s32.totalorder %s92, %s108
    %p110 = scmp.eq.s32.totalorder %s16, 0
    %p111 = por %p109, %p110
    %s112 = ssub.s32 %s17, %s29
    %p113 = scmp.eq.s32.totalorder %s112, 0
    %s115 = sadd.s32 %s114, 1
    %s116 = scalar_select %p113, %s114, %s115
    %p119 = pneg %p113
    %p120 = scmp.eq.s32.totalorder %s10, 1
    %p121 = por %p119, %p120
    %p122 = scmp.ne.s32.totalorder %s114, %s117
    %p123 = scmp.eq.s32.totalorder %s10, 0
    %p124 = por %p122, %p123
    %p125 = scmp.ne.s32.totalorder %s114, %s117
    %p126 = scmp.eq.s32.totalorder %s15, 1
    %p127 = por %p125, %p126
    %p128 = scmp.ne.s32.totalorder %s117, %s118
    %p129 = scmp.eq.s32.totalorder %s15, 0
    %p130 = por %p128, %p129
    %p131 = scmp.ne.s32.totalorder %s117, %s118
    %p132 = scmp.eq.s32.totalorder %s16, 1
    %p133 = por %p131, %p132
    %p135 = scmp.ne.s32.totalorder %s118, %s134
    %p136 = scmp.eq.s32.totalorder %s16, 0
    %p137 = por %p135, %p136
    %p138 = scmp.le.s32.totalorder 1, %s10
    %p139 = scmp.lt.s32.totalorder %s10, 3
    %p140 = pnand %p138, %p139
    %p141 = pneg %p140
    // Predicated region
    $region9: #{dice_loss.1} parent=5 // pred_check
      _
    $region10: #{dice_loss.1} parent=5 // pred_check_branch
      %143 = sbr.rel (%p140) target = $region12
    $region11: #{dice_loss.1} parent=5 // pred_region
      %s144 = ssub.s32 %s10, 1
    $region12: #{dice_loss.1} parent=5 // pred_fallthru
      _
    %p145 = scmp.lt.s32.totalorder %s10, 2
    // Predicated region
    $region13: #{dice_loss.1} parent=5 // pred_check
      %p146 = pneg %p145
    $region14: #{dice_loss.1} parent=5 // pred_check_branch
      %148 = sbr.rel (%p146) target = $region16
    $region15: #{dice_loss.1} parent=5 // pred_region
      // Predicated region
      $region17: #{dice_loss.1} parent=15 // pred_check
        %p149 = pneg %p44
      $region18: #{dice_loss.1} parent=15 // pred_check_branch
        %151 = sbr.rel (%p149) target = $region20
      $region19: #{dice_loss.1} parent=15 // pred_region
        %p152 = scmp.lt.s32.totalorder %s17, 1
        %s153 = scalar_select %p152, %s17, 1
        %p154 = scmp.lt.s32.totalorder %s18, 0
        %s155 = scalar_select %p154, %s18, 0
        %s156 = sadd.s32 %s155, %s153
        %s157 = smul.addr %s156, 8
        %s158 = scalar_lea.vmem %s0, %s157
      $region20: #{dice_loss.1} parent=15 // pred_fallthru
        _
      // Predicated region
      $region21: #{dice_loss.1} parent=15 // pred_check
        %p159 = pneg %p72
      $region22: #{dice_loss.1} parent=15 // pred_check_branch
        %161 = sbr.rel (%p159) target = $region24
      $region23: #{dice_loss.1} parent=15 // pred_region
        %p162 = scmp.lt.s32.totalorder %s17, 1
        %s163 = scalar_select %p162, %s17, 1
        %p164 = scmp.lt.s32.totalorder %s18, 0
        %s165 = scalar_select %p164, %s18, 0
        %s166 = sadd.s32 %s165, %s163
        %s167 = smul.addr %s166, 8
        %s168 = scalar_lea.vmem %s1, %s167
      $region24: #{dice_loss.1} parent=15 // pred_fallthru
        _
    $region16: #{dice_loss.1} parent=5 // pred_fallthru
      _
    %p169 = scmp.le.s32.totalorder 1, %s10
    %p170 = scmp.lt.s32.totalorder %s10, 3
    %p171 = pnand %p169, %p170
    %p172 = pneg %p171
    // Predicated region
    $region25: #{dice_loss.1} parent=5 // pred_check
      _
    $region26: #{dice_loss.1} parent=5 // pred_check_branch
      %174 = sbr.rel (%p171) target = $region28
    $region27: #{dice_loss.1} parent=5 // pred_region
      %s175 = ssub.s32 %s10, 1
      %p176 = scmp.lt.s32.totalorder %s19, 1
      %s177 = scalar_select %p176, %s19, 1
      %p178 = scmp.lt.s32.totalorder %s20, 0
      %s179 = scalar_select %p178, %s20, 0
      %s180 = sadd.s32 %s179, %s177
      %s181 = smul.addr %s180, 8
      %s182 = scalar_lea.vmem %s0, %s181
      %p183 = pneg %p50
      %p184 = pneg %p47
      %p185 = scmp.lt.s32.totalorder %s19, 1
      %s186 = scalar_select %p185, %s19, 1
      %p187 = scmp.lt.s32.totalorder %s20, 0
      %s188 = scalar_select %p187, %s20, 0
      %s189 = sadd.s32 %s188, %s186
      %s190 = smul.addr %s189, 8
      %s191 = scalar_lea.vmem %s1, %s190
      %p192 = pneg %p78
      %p193 = pneg %p75
      %p194 = pneg %p104
      %p195 = pneg %p101
      %p196 = scmp.lt.s32.totalorder %s19, 1
      %s197 = scalar_select %p196, %s19, 1
      %s198 = scalar_lea.vmem %s2, %s197
      %p199 = pneg %p130
      %p200 = pneg %p127
      %p201 = scmp.lt.s32.totalorder %s19, 1
      %s202 = scalar_select %p201, %s19, 1
      %s203 = scalar_lea.vmem %s3, %s202
      %p204 = scmp.lt.s32.totalorder %s19, 1
      %s205 = scalar_select %p204, %s19, 1
      %p206 = scmp.lt.s32.totalorder %s20, 0
      %s207 = scalar_select %p206, %s20, 0
      %s208 = sadd.s32 %s207, %s205
      %s209 = smul.addr %s208, 8
      %s210 = scalar_lea.vmem %s0, %s209
      %p211 = scmp.lt.s32.totalorder %s19, 1
      %s212 = scalar_select %p211, %s19, 1
      %p213 = scmp.lt.s32.totalorder %s20, 0
      %s214 = scalar_select %p213, %s20, 0
      %s215 = sadd.s32 %s214, %s212
      %s216 = smul.addr %s215, 8
      %s217 = scalar_lea.vmem %s1, %s216
      %p218 = scmp.lt.s32.totalorder %s19, 1
      %s219 = scalar_select %p218, %s19, 1
      %s220 = scalar_lea.vmem %s2, %s219
      %p221 = scmp.lt.s32.totalorder %s19, 1
      %s222 = scalar_select %p221, %s19, 1
      %s223 = scalar_lea.vmem %s3, %s222
      %p224 = scmp.eq.s32.totalorder %s20, 0
      // Predicated region
      $region29: #{dice_loss.1} parent=27 // pred_check
        %p225 = pneg %p224
      $region30: #{dice_loss.1} parent=27 // pred_check_branch
        %227 = sbr.rel (%p225) target = $region32
      $region31: #{dice_loss.1} parent=27 // pred_region
        %228 = vst [vmem:[#allocation2] sm:$0x1] 0.0
        %229 = vst [vmem:[#allocation3] sm:$0x1] 0.0
      $region32: #{dice_loss.1} parent=27 // pred_fallthru
        _
      %v230 = vld [vmem:[%s210] sm:$0xff]
      %v231 = vld [vmem:[%s217] sm:$0xff]
      %v232 = vld [vmem:[#allocation2] sm:$0x1]
      %v233 = vmul.f32 %v230, %v231
      %v234 = vrot.slane %v233, 4
      %v235 = vadd.f32 %v233, %v234
      %v236 = vrot.slane %v235, 2
      %v237 = vadd.f32 %v235, %v236
      %v238 = vrot.slane %v237, 1
      %v239 = vadd.f32 %v237, %v238
      %v240 = vadd.f32 %v232, %v239
      %241 = vst [vmem:[#allocation2] sm:$0x1] %v240
      %v242 = vld [vmem:[#allocation3] sm:$0x1]
      %v243 = vadd.f32 %v230, %v231
      %v244 = vrot.slane %v243, 4
      %v245 = vadd.f32 %v243, %v244
      %v246 = vrot.slane %v245, 2
      %v247 = vadd.f32 %v245, %v246
      %v248 = vrot.slane %v247, 1
      %v249 = vadd.f32 %v247, %v248
      %v250 = vadd.f32 %v242, %v249
      %251 = vst [vmem:[#allocation3] sm:$0x1] %v250
      // Predicated region
      $region33: #{dice_loss.1} parent=27 // pred_check
        %p252 = pneg %p224
      $region34: #{dice_loss.1} parent=27 // pred_check_branch
        %254 = sbr.rel (%p252) target = $region36
      $region35: #{dice_loss.1} parent=27 // pred_region
        %v255 = vld [vmem:[#allocation2] sm:$0x1]
        %256 = vst [vmem:[%s220] sm:$0x1] %v255
        %v257 = vld [vmem:[#allocation3] sm:$0x1]
        %258 = vst [vmem:[%s223] sm:$0x1] %v257
      $region36: #{dice_loss.1} parent=27 // pred_fallthru
        _
      %p259 = scmp.lt.s32.totalorder %s19, 1
      %s260 = scalar_select %p259, %s19, 1
      %s261 = scalar_lea.vmem %s2, %s260
      %p262 = scmp.lt.s32.totalorder %s19, 1
      %s263 = scalar_select %p262, %s19, 1
      %s264 = scalar_lea.vmem %s3, %s263
      // Predicated region
      $region37: #{dice_loss.1} parent=27 // pred_check
        %p265 = pneg %p101
      $region38: #{dice_loss.1} parent=27 // pred_check_branch
        %267 = sbr.rel (%p265) target = $region40
      $region39: #{dice_loss.1} parent=27 // pred_region
        _
      $region40: #{dice_loss.1} parent=27 // pred_fallthru
        _
      // Predicated region
      $region41: #{dice_loss.1} parent=27 // pred_check
        %p268 = pneg %p127
      $region42: #{dice_loss.1} parent=27 // pred_check_branch
        %270 = sbr.rel (%p268) target = $region44
      $region43: #{dice_loss.1} parent=27 // pred_region
        _
      $region44: #{dice_loss.1} parent=27 // pred_fallthru
        _
    $region28: #{dice_loss.1} parent=5 // pred_fallthru
      _
    %p271 = scmp.le.s32.totalorder 2, %s10
    // Predicated region
    $region45: #{dice_loss.1} parent=5 // pred_check
      %p272 = pneg %p271
    $region46: #{dice_loss.1} parent=5 // pred_check_branch
      %274 = sbr.rel (%p272) target = $region48
    $region47: #{dice_loss.1} parent=5 // pred_region
      %s275 = ssub.s32 %s10, 2
      // Predicated region
      $region49: #{dice_loss.1} parent=47 // pred_check
        %p276 = pneg %p107
      $region50: #{dice_loss.1} parent=47 // pred_check_branch
        %278 = sbr.rel (%p276) target = $region52
      $region51: #{dice_loss.1} parent=47 // pred_region
        %p279 = scmp.lt.s32.totalorder %s21, 1
        %s280 = scalar_select %p279, %s21, 1
        %s281 = scalar_lea.vmem %s2, %s280
      $region52: #{dice_loss.1} parent=47 // pred_fallthru
        _
      // Predicated region
      $region53: #{dice_loss.1} parent=47 // pred_check
        %p282 = pneg %p133
      $region54: #{dice_loss.1} parent=47 // pred_check_branch
        %284 = sbr.rel (%p282) target = $region56
      $region55: #{dice_loss.1} parent=47 // pred_region
        %p285 = scmp.lt.s32.totalorder %s21, 1
        %s286 = scalar_select %p285, %s21, 1
        %s287 = scalar_lea.vmem %s3, %s286
      $region56: #{dice_loss.1} parent=47 // pred_fallthru
        _
    $region48: #{dice_loss.1} parent=5 // pred_fallthru
      _
  $region6: #{dice_loss.1} parent=0 // loop_footer
    %s14 = sadd.s32 1, %s10
  $region7: #{dice_loss.1} parent=0 // loop_footer_branch
    %9 = sbr.rel target = $region3
  $region8: #{dice_loss.1} parent=0 // loop_exit
    _

</llo_original>
